<compile_context>
chip_gen: v7x
topology: tpu7x:2x2x1
jax: 0.10.0
libtpu: 0.0.40
codegen_flags: <defaults>
</compile_context>

<pallas_src>
import functools
import numpy as np

import jax
import jax.numpy as jnp
from jax.experimental import pallas as pl
from jax.experimental.pallas import tpu as pltpu

F32 = jnp.float32
BF16 = jnp.bfloat16
LN_EPS = 1e-6  # reference uses partial(nn.LayerNorm, eps=1e-06) everywhere

_LAYER_KEYS = ('ln1_w', 'ln1_b', 'wq', 'bq', 'wk', 'bk', 'wv', 'bv',
               'proj_w', 'proj_b', 'ln2_w', 'ln2_b',
               'fc1_w', 'fc1_b', 'fc2_w', 'fc2_b')
_MM_KEYS = {'wq', 'wk', 'wv', 'proj_w', 'fc1_w', 'fc2_w'}


# --------------------------------------------------------------------------
# Tile-size helpers
# --------------------------------------------------------------------------
def _pick_row_tile(M, K, N, vmem_budget=24 << 20):
    """Largest row tile dividing M whose double-buffered resident set fits VMEM."""
    def fits(tm):
        resident = 2 * tm * K * 4 + 2 * K * N * 2 + 2 * tm * N * 4
        return resident <= vmem_budget
    cap = min(M, 1024)
    for align in (256, 128, 8, 1):
        t = (cap // align) * align
        while t >= align:
            if M % t == 0 and fits(t):
                return t
            t -= align
    return M


def _pick_batch_tile(B, N, target_rows=256, max_rows=2048):
    """Smallest divisor of B giving >= target_rows tokens per step (capped)."""
    best = 1
    for bt in range(1, B + 1):
        if B % bt != 0:
            continue
        if bt * N > max_rows:
            break
        best = bt
        if bt * N >= target_rows:
            break
    return best


# --------------------------------------------------------------------------
# Patch-embedding matmul kernel
# --------------------------------------------------------------------------
def _matmul_bias_kernel(x_ref, w_ref, b_ref, o_ref):
    # bf16 operands (cast inside the kernel, hidden under the MXU), f32 acc.
    o_ref[...] = (jnp.dot(x_ref[...].astype(BF16), w_ref[...].astype(BF16),
                          preferred_element_type=F32) + b_ref[...])


def matmul_bias(x, w, b):
    """x: [M, K] f32, w: [K, N] (bf16 pre-cast), b: [1, N] f32 -> [M, N] f32."""
    M, K = x.shape
    N = w.shape[1]
    tm = _pick_row_tile(M, K, N)
    return pl.pallas_call(
        _matmul_bias_kernel,
        out_shape=jax.ShapeDtypeStruct((M, N), F32),
        grid=(M // tm,),
        in_specs=[pl.BlockSpec((tm, K), lambda i: (i, 0)),
                  pl.BlockSpec((K, N), lambda i: (0, 0)),
                  pl.BlockSpec((1, N), lambda i: (0, 0))],
        out_specs=pl.BlockSpec((tm, N), lambda i: (i, 0)),
        compiler_params=pltpu.CompilerParams(
            dimension_semantics=("parallel",)),
    )(x, w, b)


# --------------------------------------------------------------------------
# Fused transformer-stack kernel (all layers of one stack in one pallas_call)
# --------------------------------------------------------------------------
def _stack_kernel(*refs, Bt, N, D, num_layers, num_heads, eps,
                  has_pre, has_post_ln, has_head, kv_tile):
    """Grid = (batch_block, layer).  The activation lives in `acc_ref` (VMEM)
    across the layer axis; only the last layer writes the HBM output."""
    it = iter(refs)
    x_ref = next(it)
    if has_pre:
        pre_w, pre_b = next(it), next(it)
    (ln1w, ln1b, wq, bq, wk, bk, wv, bv, projw, projb,
     ln2w, ln2b, fc1w, fc1b, fc2w, fc2b) = (next(it) for _ in range(16))
    if has_post_ln:
        plnw, plnb = next(it), next(it)
    if has_head:
        hw, hb = next(it), next(it)
    o_ref = next(it)
    acc_ref = next(it)

    l_idx = pl.program_id(1)
    R = Bt * N
    H = num_heads
    hd = D // H
    scale = float(hd) ** -0.5

    def ln(v, w, b):
        mu = jnp.mean(v, axis=-1, keepdims=True)
        var = jnp.mean((v - mu) ** 2, axis=-1, keepdims=True)
        return (v - mu) * jax.lax.rsqrt(var + eps) * w + b

    def mm(a, w, b=None):
        r = jnp.dot(a.astype(BF16), w.astype(BF16), preferred_element_type=F32)
        if b is not None:
            r = r + b
        return r

    # ---- prologue (layer 0): load tokens, optional encoder->decoder proj ----
    @pl.when(l_idx == 0)
    def _():
        x0 = x_ref[...].reshape(R, x_ref.shape[-1])
        if has_pre:
            x0 = mm(x0, pre_w[...], pre_b[...])
        acc_ref[...] = x0.astype(F32)

    x = acc_ref[...]                                  # [R, D] f32, VMEM-resident

    # ---- attention (pre-norm) ----
    h1 = ln(x, ln1w[0], ln1b[0])
    q = mm(h1, wq[0], bq[0]) * scale                  # scale folded into q
    k = mm(h1, wk[0], bk[0])
    v = mm(h1, wv[0], bv[0])

    def to_heads(t):                                  # [R, D] -> [Bt*H, N, hd]
        return jnp.swapaxes(t.reshape(Bt, N, H, hd), 1, 2).reshape(Bt * H, N, hd)

    qh = to_heads(q).astype(BF16)
    kh = to_heads(k).astype(BF16)
    vh = to_heads(v).astype(BF16)

    BH = Bt * H
    m_i = jnp.full((BH, N, 1), -jnp.inf, F32)
    l_i = jnp.zeros((BH, N, 1), F32)
    o_acc = jnp.zeros((BH, N, hd), F32)
    # Online softmax over kv chunks: caps VMEM at O(BH * N * kv_tile) instead
    # of materializing the full [BH, N, N] score tensor (v7x 64 MiB VMEM).
    for s0 in range(0, N, kv_tile):
        s1 = min(s0 + kv_tile, N)
        kc = kh[:, s0:s1]
        vc = vh[:, s0:s1]
        s = jnp.einsum('bqd,bkd->bqk', qh, kc, preferred_element_type=F32)
        m_new = jnp.maximum(m_i, jnp.max(s, axis=-1, keepdims=True))
        a = jnp.exp(m_i - m_new)
        p = jnp.exp(s - m_new)
        l_i = a * l_i + jnp.sum(p, axis=-1, keepdims=True)
        o_acc = a * o_acc + jnp.einsum('bqk,bkd->bqd', p.astype(BF16), vc,
                                       preferred_element_type=F32)
        m_i = m_new
    o = o_acc * pl.reciprocal(l_i, approx=True)       # EUP slot

    ao = jnp.swapaxes(o.reshape(Bt, H, N, hd), 1, 2).reshape(R, D)
    x = x + mm(ao, projw[0], projb[0])

    # ---- MLP (pre-norm) ----
    h2 = ln(x, ln2w[0], ln2b[0])
    mlp_h = mm(h2, fc1w[0], fc1b[0])
    # TODO(synk): torch nn.GELU is exact (erf); tanh approximation used here
    # because erf lowering is not guaranteed on the Mosaic TPU backend.
    mlp_h = jax.nn.gelu(mlp_h, approximate=True)
    x = x + mm(mlp_h, fc2w[0], fc2b[0])

    acc_ref[...] = x

    # ---- epilogue (last layer): final LayerNorm + reconstruction head ----
    @pl.when(l_idx == num_layers - 1)
    def _():
        y = acc_ref[...]
        if has_post_ln:
            y = ln(y, plnw[...], plnb[...])
        if has_head:
            y = mm(y, hw[...], hb[...])
        o_ref[...] = y.reshape(Bt, N, y.shape[-1])


def transformer_stack(x, layers, num_heads, *, pre=None, post_ln=None,
                      head=None, eps=LN_EPS):
    """x: [B, N, Din] f32 -> [B, N, out_dim] f32, running all L layers of the
    stack inside one pallas_call.

    layers  : dict of per-layer weights stacked along a leading L axis.
    pre     : optional (w, b) input projection (Din -> D), fused at l==0.
    post_ln : optional (w, b) final LayerNorm, fused at l==L-1.
    head    : optional (w, b) linear head (D -> out_dim), fused at l==L-1.
    """
    B, N, Din = x.shape
    L = int(layers['ln1_w'].shape[0])
    D = int(layers['ln1_w'].shape[-1])
    assert D % num_heads == 0
    out_dim = int(head[0].shape[-1]) if head is not None else D

    Bt = _pick_batch_tile(B, N)
    kv_tile = N if N <= 256 else 256

    inputs = [x]
    specs = [pl.BlockSpec((Bt, N, Din), lambda b, l: (b, 0, 0))]
    vmem = 2 * Bt * N * Din * 4

    def add_const(arr):
        nonlocal vmem
        inputs.append(arr)
        nd = arr.ndim
        specs.append(pl.BlockSpec(arr.shape, lambda b, l, _n=nd: (0,) * _n))
        vmem += 2 * arr.size * arr.dtype.itemsize

    def add_layer(arr):
        nonlocal vmem
        inputs.append(arr)
        nd = arr.ndim
        specs.append(pl.BlockSpec((1,) + tuple(arr.shape[1:]),
                                  lambda b, l, _n=nd: (l,) + (0,) * (_n - 1)))
        vmem += 2 * (arr.size // arr.shape[0]) * arr.dtype.itemsize

    if pre is not None:
        add_const(pre[0]); add_const(pre[1])
    for key in _LAYER_KEYS:
        add_layer(layers[key])
    if post_ln is not None:
        add_const(post_ln[0]); add_const(post_ln[1])
    if head is not None:
        add_const(head[0]); add_const(head[1])

    vmem += 2 * Bt * N * out_dim * 4      # output block (double-buffered)
    vmem += Bt * N * D * 4                # resident activation scratch
    # Explicit scoped-VMEM limit derived from the footprint; capped at 64 MiB
    # so the same setting is legal on v5e / v6e / v7x.
    vmem_limit = int(min(max(2 * vmem, 16 << 20), 64 << 20))

    kernel = functools.partial(
        _stack_kernel, Bt=Bt, N=N, D=D, num_layers=L, num_heads=num_heads,
        eps=eps, has_pre=pre is not None, has_post_ln=post_ln is not None,
        has_head=head is not None, kv_tile=kv_tile)

    return pl.pallas_call(
        kernel,
        out_shape=jax.ShapeDtypeStruct((B, N, out_dim), F32),
        grid=(B // Bt, L),
        in_specs=specs,
        out_specs=pl.BlockSpec((Bt, N, out_dim), lambda b, l: (b, 0, 0)),
        scratch_shapes=[pltpu.VMEM((Bt * N, D), F32)],
        compiler_params=pltpu.CompilerParams(
            dimension_semantics=("parallel", "arbitrary"),
            vmem_limit_bytes=vmem_limit),
    )(*inputs)


# --------------------------------------------------------------------------
# Model pieces (glue in plain JAX, compute in Pallas)
# --------------------------------------------------------------------------
def tubelet_embed(x, w, b, patch, ts):
    """Conv3d(kernel=stride=(ts,p,p)) == non-overlapping patch extract + matmul."""
    B, C, T, H, W = x.shape
    Tt, Hp, Wp = T // ts, H // patch, W // patch
    xr = x.reshape(B, C, Tt, ts, Hp, patch, Wp, patch)
    xr = xr.transpose(0, 2, 4, 6, 1, 3, 5, 7)        # [B, Tt, Hp, Wp, C, ts, p, p]
    flat = xr.reshape(B * Tt * Hp * Wp, C * ts * patch * patch)
    out = matmul_bias(flat, w, b)
    return out.reshape(B, Tt * Hp * Wp, -1)          # [B, N, D]


def init_block_params(key, D, mlp_ratio):
    Dm = int(D * mlp_ratio)
    ks = jax.random.split(key, 6)
    std = 0.02
    return {
        'ln1_w': jnp.ones((1, D), F32), 'ln1_b': jnp.zeros((1, D), F32),
        'wq': jax.random.normal(ks[0], (D, D), F32) * std, 'bq': jnp.zeros((1, D), F32),
        'wk': jax.random.normal(ks[1], (D, D), F32) * std, 'bk': jnp.zeros((1, D), F32),
        'wv': jax.random.normal(ks[2], (D, D), F32) * std, 'bv': jnp.zeros((1, D), F32),
        'proj_w': jax.random.normal(ks[3], (D, D), F32) * std,
        'proj_b': jnp.zeros((1, D), F32),
        'ln2_w': jnp.ones((1, D), F32), 'ln2_b': jnp.zeros((1, D), F32),
        'fc1_w': jax.random.normal(ks[4], (D, Dm), F32) * std,
        'fc1_b': jnp.zeros((1, Dm), F32),
        'fc2_w': jax.random.normal(ks[5], (Dm, D), F32) * std,
        'fc2_b': jnp.zeros((1, D), F32),
    }


def prepare_params(params):
    """One-time prep: stack per-layer weights along L, pre-cast MXU weights bf16."""
    def prep(blocks):
        stacked = {k: jnp.stack([blk[k] for blk in blocks], axis=0)
                   for k in _LAYER_KEYS}
        return {k: (v.astype(BF16) if k in _MM_KEYS else v.astype(F32))
                for k, v in stacked.items()}
    out = dict(params)
    out['encoder'] = prep(params['encoder'])
    out['rgb_decoder'] = prep(params['rgb_decoder'])
    out['depth_decoder'] = prep(params['depth_decoder'])
    for k in ('rgb_patch_w', 'depth_patch_w', 'e2d_w', 'rgb_head_w', 'depth_head_w'):
        out[k] = params[k].astype(BF16)
    return out


def cross_modal_videomae_forward(params, cfg, rgb_frames, depth_maps,
                                 rgb_masks_np, depth_masks_np):
    B, C, T, H, W = rgb_frames.shape
    assert C == 3
    p, ts = cfg['patch_size'], cfg['tubelet_size']
    D, Dd = cfg['embed_dim'], cfg['decoder_embed_dim']
    Hp, Wp = H // p, W // p
    nppf = Hp * Wp
    Tt = T // ts
    num_tubelets = Tt * nppf
    n_vis = int(num_tubelets * (1 - cfg['mask_ratio']))

    # --- tubelet embeddings + positional embedding ---
    rgb_embed = tubelet_embed(rgb_frames, params['rgb_patch_w'],
                              params['rgb_patch_b'], p, ts) + params['pos_embed']
    depth_embed = tubelet_embed(depth_maps, params['depth_patch_w'],
                                params['depth_patch_b'], p, ts) + params['pos_embed']

    # --- masking: masked tokens are dropped; keep only visible tubelets
    #     (same row-major order as boolean indexing in the reference). ---
    # TODO(synk): move the gather/scatter into a Pallas PrefetchScalarGridSpec
    # kernel so the trace does not depend on host-side mask indices.
    vis_rgb_idx = np.stack([np.nonzero(~rgb_masks_np[b])[0] for b in range(B)],
                           axis=0).astype(np.int32)
    vis_depth_idx = np.stack([np.nonzero(~depth_masks_np[b])[0] for b in range(B)],
                             axis=0).astype(np.int32)
    assert vis_rgb_idx.shape == (B, n_vis) and vis_depth_idx.shape == (B, n_vis)
    vis_rgb_idx_j = jnp.asarray(vis_rgb_idx)
    vis_depth_idx_j = jnp.asarray(vis_depth_idx)
    rgb_vis = jnp.take_along_axis(rgb_embed, vis_rgb_idx_j[..., None], axis=1)
    depth_vis = jnp.take_along_axis(depth_embed, vis_depth_idx_j[..., None], axis=1)

    # --- shared encoder: both modalities in one batched call, all layers in a
    #     single pallas_call; encoder_norm fused into the last layer. ---
    x = jnp.concatenate([rgb_vis, depth_vis], axis=0)        # [2B, n_vis, D]
    x = transformer_stack(x, params['encoder'], cfg['encoder_num_heads'],
                          post_ln=(params['enc_norm_w'], params['enc_norm_b']))
    enc_rgb, enc_depth = x[:B], x[B:]

    # --- reinsert: masked slots get the re-initialized (trunc-normal) mask
    #     token, visible slots get encoded embeddings scattered back in order. ---
    batch_ix = jnp.arange(B)[:, None]
    rgb_full = jnp.tile(params['mask_token2'].astype(F32), (B, num_tubelets, 1))
    depth_full = jnp.tile(params['mask_token2'].astype(F32), (B, num_tubelets, 1))
    rgb_full = rgb_full.at[batch_ix, vis_rgb_idx_j].set(enc_rgb)
    depth_full = depth_full.at[batch_ix, vis_depth_idx_j].set(enc_depth)

    # encoder->decoder projection fused into decoder layer 0 (only when dims
    # differ, as in the reference).
    pre = (params['e2d_w'], params['e2d_b']) if D != Dd else None

    # TODO(synk): on v7x the two independent decoders could be run on the two
    # TensorCores concurrently via a leading "parallel" modality grid axis.
    rgb_recon = transformer_stack(
        rgb_full, params['rgb_decoder'], cfg['decoder_num_heads'],
        pre=pre,
        post_ln=(params['rgb_dec_norm_w'], params['rgb_dec_norm_b']),
        head=(params['rgb_head_w'], params['rgb_head_b']))
    depth_recon = transformer_stack(
        depth_full, params['depth_decoder'], cfg['decoder_num_heads'],
        pre=pre,
        post_ln=(params['depth_dec_norm_w'], params['depth_dec_norm_b']),
        head=(params['depth_head_w'], params['depth_head_b']))

    # --- per-frame reshapes (same row-major .view as the reference) ---
    rgb_frame_recon = rgb_recon.reshape(B, T, nppf, p * p * 3)
    depth_frame_recon = depth_recon.reshape(B, T, nppf, p * p * 1)

    rm = np.broadcast_to(rgb_masks_np.reshape(B, Tt, nppf)[:, :, None, :],
                         (B, Tt, ts, nppf)).reshape(B, T, nppf)
    dm = np.broadcast_to(depth_masks_np.reshape(B, Tt, nppf)[:, :, None, :],
                         (B, Tt, ts, nppf)).reshape(B, T, nppf)
    # torch .long() -> int64; int32 here (JAX x64 disabled by default)
    rgb_masks_per_frame = jnp.asarray(rm.astype(np.int32))
    depth_masks_per_frame = jnp.asarray(dm.astype(np.int32))

    return rgb_frame_recon, depth_frame_recon, rgb_masks_per_frame, depth_masks_per_frame


# --------------------------------------------------------------------------
# Main
# --------------------------------------------------------------------------
if __name__ == "__main__":
    cfg = dict(img_size=16, patch_size=8, num_frames=4, tubelet_size=2,
               embed_dim=32, encoder_num_heads=4, encoder_mlp_ratio=4,
               num_layers_encoder=2,
               decoder_embed_dim=16, decoder_num_heads=2, decoder_mlp_ratio=4,
               num_layers_decoder=1,
               mask_ratio=0.5)
    B = 2
    p, ts = cfg['patch_size'], cfg['tubelet_size']
    D, Dd = cfg['embed_dim'], cfg['decoder_embed_dim']
    Hp = Wp = cfg['img_size'] // p
    nppf = Hp * Wp
    Tt = cfg['num_frames'] // ts
    num_tubelets = Tt * nppf
    std = 0.02

    ks = iter(jax.random.split(jax.random.PRNGKey(0), 64))
    nk = lambda: next(ks)
    tn = lambda key, shape: jax.random.truncated_normal(key, -2.0, 2.0, shape, F32) * std

    params = {
        'rgb_patch_w': jax.random.normal(nk(), (3 * ts * p * p, D), F32) * std,
        'rgb_patch_b': jnp.zeros((1, D), F32),
        'depth_patch_w': jax.random.normal(nk(), (1 * ts * p * p, D), F32) * std,
        'depth_patch_b': jnp.zeros((1, D), F32),
        'pos_embed': tn(nk(), (1, num_tubelets, D)),
        'mask_token2': tn(nk(), (1, 1, D)),
        'encoder': [init_block_params(nk(), D, cfg['encoder_mlp_ratio'])
                    for _ in range(cfg['num_layers_encoder'])],
        'enc_norm_w': jnp.ones((1, D), F32), 'enc_norm_b': jnp.zeros((1, D), F32),
        'e2d_w': jax.random.normal(nk(), (D, Dd), F32) * std,
        'e2d_b': jnp.zeros((1, Dd), F32),
        'rgb_decoder': [init_block_params(nk(), Dd, cfg['decoder_mlp_ratio'])
                        for _ in range(cfg['num_layers_decoder'])],
        'rgb_dec_norm_w': jnp.ones((1, Dd), F32), 'rgb_dec_norm_b': jnp.zeros((1, Dd), F32),
        'rgb_head_w': jax.random.normal(nk(), (Dd, ts * p * p * 3), F32) * std,
        'rgb_head_b': jnp.zeros((1, ts * p * p * 3), F32),
        'depth_decoder': [init_block_params(nk(), Dd, cfg['decoder_mlp_ratio'])
                          for _ in range(cfg['num_layers_decoder'])],
        'depth_dec_norm_w': jnp.ones((1, Dd), F32), 'depth_dec_norm_b': jnp.zeros((1, Dd), F32),
        'depth_head_w': jax.random.normal(nk(), (Dd, ts * p * p * 1), F32) * std,
        'depth_head_b': jnp.zeros((1, ts * p * p * 1), F32),
    }

    # One-time parameter prep: stack per-layer weights, pre-cast MXU weights bf16.
    prepped = prepare_params(params)

    # Random per-(batch, temporal-position) masking, like torch.randperm in forward().
    num_masks = int(nppf * cfg['mask_ratio'])

    def make_masks(mkey):
        m = np.zeros((B, num_tubelets), dtype=bool)
        for b in range(B):
            for t in range(Tt):
                mkey, sub = jax.random.split(mkey)
                perm = np.asarray(jax.random.permutation(sub, nppf))
                m[b, t * nppf + perm[:num_masks]] = True
        return m, mkey

    mkey = jax.random.PRNGKey(42)
    rgb_masks_np, mkey = make_masks(mkey)
    depth_masks_np, mkey = make_masks(mkey)

    kr, kd = jax.random.split(jax.random.PRNGKey(0), 2)
    rgb_frames = jax.random.normal(
        kr, (B, 3, cfg['num_frames'], cfg['img_size'], cfg['img_size']), F32)
    depth_maps = jax.random.normal(
        kd, (B, 1, cfg['num_frames'], cfg['img_size'], cfg['img_size']), F32)

    outs = cross_modal_videomae_forward(prepped, cfg, rgb_frames, depth_maps,
                                        rgb_masks_np, depth_masks_np)
    for o in outs:
        jax.block_until_ready(o)

    assert outs[0].shape == (B, cfg['num_frames'], nppf, p * p * 3)
    assert outs[1].shape == (B, cfg['num_frames'], nppf, p * p * 1)
    assert outs[2].shape == (B, cfg['num_frames'], nppf)
    assert outs[3].shape == (B, cfg['num_frames'], nppf)
    assert all(bool(jnp.all(jnp.isfinite(o.astype(F32)))) for o in outs[:2])
    print("KERNEL_OK")
</pallas_src>

<mosaic_0001>
module attributes {stable_mosaic.version = 11 : i64} {
  func.func @_matmul_bias_kernel(%arg0: i32, %arg1: memref<16x384xf32, #tpu.memory_space<vmem>>, %arg2: memref<384x32xbf16, #tpu.memory_space<vmem>>, %arg3: memref<1x32xf32, #tpu.memory_space<vmem>>, %arg4: memref<16x32xf32, #tpu.memory_space<vmem>>) attributes {dimension_semantics = [#tpu.dimension_semantics<parallel>], iteration_bounds = array<i64: 1>, scalar_prefetch = 0 : i64, scratch_operands = 0 : i64, tpu.core_type = #tpu.core_type<tc>, window_params = [{transform_indices = @transform_0, window_bounds = array<i64: 16, 384>}, {pipeline_mode = #tpu.pipeline_mode<synchronous>, transform_indices = @transform_1, window_bounds = array<i64: 384, 32>}, {pipeline_mode = #tpu.pipeline_mode<synchronous>, transform_indices = @transform_2, window_bounds = array<i64: 1, 32>}, {transform_indices = @transform_3, window_bounds = array<i64: 16, 32>}]} {
    %c0 = arith.constant 0 : index
    %c0_0 = arith.constant 0 : index
    %0 = vector.load %arg1[%c0, %c0_0] : memref<16x384xf32, #tpu.memory_space<vmem>>, vector<16x384xf32>
    %1 = arith.truncf %0 : vector<16x384xf32> to vector<16x384xbf16>
    %c0_1 = arith.constant 0 : index
    %c0_2 = arith.constant 0 : index
    %2 = vector.load %arg2[%c0_1, %c0_2] : memref<384x32xbf16, #tpu.memory_space<vmem>>, vector<384x32xbf16>
    %cst = arith.constant dense<0.000000e+00> : vector<16x32xf32>
    %3 = tpu.matmul %1, %2, %cst {dimension_numbers = #tpu.dot_dimension_numbers<[1], [0], [0], [1], [0, 0, 1, 1], [], []>} : vector<16x384xbf16>, vector<384x32xbf16>, vector<16x32xf32> -> vector<16x32xf32>
    %c0_3 = arith.constant 0 : index
    %c0_4 = arith.constant 0 : index
    %4 = vector.load %arg3[%c0_3, %c0_4] : memref<1x32xf32, #tpu.memory_space<vmem>>, vector<1x32xf32>
    %5 = vector.broadcast %4 : vector<1x32xf32> to vector<16x32xf32>
    %6 = arith.addf %3, %5 : vector<16x32xf32>
    %c0_5 = arith.constant 0 : index
    %c0_6 = arith.constant 0 : index
    %7 = vector.load %arg4[%c0_5, %c0_6] : memref<16x32xf32, #tpu.memory_space<vmem>>, vector<16x32xf32>
    tpu.vector_store %arg4[%c0_5, %c0_6], %6 {strides = array<i32>} : memref<16x32xf32, #tpu.memory_space<vmem>>, vector<16x32xf32>,
    return
  }
  func.func @transform_0(%arg0: i32) -> (i32, i32) {
    %c0_i32 = arith.constant 0 : i32
    %c0_i32_0 = arith.constant 0 : i32
    return %arg0, %c0_i32 : i32, i32
  }
  func.func @transform_1(%arg0: i32) -> (i32, i32) {
    %c0_i32 = arith.constant 0 : i32
    %c0_i32_0 = arith.constant 0 : i32
    %c0_i32_1 = arith.constant 0 : i32
    return %c0_i32, %c0_i32_0 : i32, i32
  }
  func.func @transform_2(%arg0: i32) -> (i32, i32) {
    %c0_i32 = arith.constant 0 : i32
    %c0_i32_0 = arith.constant 0 : i32
    %c0_i32_1 = arith.constant 0 : i32
    return %c0_i32, %c0_i32_0 : i32, i32
  }
  func.func @transform_3(%arg0: i32) -> (i32, i32) {
    %c0_i32 = arith.constant 0 : i32
    %c0_i32_0 = arith.constant 0 : i32
    return %arg0, %c0_i32 : i32, i32
  }
}

</mosaic_0001>

<llo_original>
// kernel: tpu_custom_call.1
$region0: #{tpu_custom_call.1}
  #allocation0 [shape = 'u32[]', space=smem, size = 0x4, offset = 0x4, fixed_abs, tag = 'smem constant byte address 0x4 - core index']
  #allocation1 [shape = 'u32[144,128]{1,0:T(1,128)}', space=vmem, size = 0x12000, scoped, tag = 'internal scratch']
  %s0 = inlined_call_operand.vmem [shape: f32[16,384], index: 0, kind: input, shape index: {}]
  %s1 = inlined_call_operand.vmem [shape: bf16[384,32], index: 1, kind: input, shape index: {}]
  %s2 = inlined_call_operand.vmem [shape: f32[1,32], index: 2, kind: input, shape index: {}]
  %s3 = inlined_call_operand.hbm [shape: f32[16,32], index: 3, kind: output, shape index: {}]
  %s4 = sld [smem:[#allocation0]]
  $region22: #{tpu_custom_call.1} parent=0
    _
  %s6 = ssub.s32 1, %s4
  %s7 = scalar_select 0, %s6, %s4
  $region1: #{tpu_custom_call.1} parent=0
    #allocation2 [shape = 'u8[8192]{0}', space=vmem, size = 0x2000, scoped, tag = 'output window, operand 0, single buffered']
    #allocation3 [shape = 's32[1]{0}', space=sflag, size = 0x4, scoped, tag = 'scoped memory for tpu_custom_call.1']
    %8 = vsyncpa [#allocation3], 0
    // Predicated region
    $region2: #{tpu_custom_call.1} parent=1 // pred_check
      _
    $region3: #{tpu_custom_call.1} parent=1 // pred_check_branch
      %10 = sbr.rel (0) target = $region5
    $region4: #{tpu_custom_call.1} parent=1 // pred_region
      _
    $region5: #{tpu_custom_call.1} parent=1 // pred_fallthru
      _
    // Predicated region
    $region6: #{tpu_custom_call.1} parent=1 // pred_check
      _
    $region7: #{tpu_custom_call.1} parent=1 // pred_check_branch
      %12 = sbr.rel (0) target = $region9
    $region8: #{tpu_custom_call.1} parent=1 // pred_region
      _
    $region9: #{tpu_custom_call.1} parent=1 // pred_fallthru
      _
    // Predicated region
    $region10: #{tpu_custom_call.1} parent=1 // pred_check
      _
    $region11: #{tpu_custom_call.1} parent=1 // pred_check_branch
      %14 = sbr.rel (0) target = $region13
    $region12: #{tpu_custom_call.1} parent=1 // pred_region
      _
    $region13: #{tpu_custom_call.1} parent=1 // pred_fallthru
      _
    %v16 = vld [vmem:[%s0] sm:$0xff]
    %v17 = vld [vmem:[%s0 + $0x8] sm:$0xff]
    %v18 = vld [vmem:[%s0 + $0x10] sm:$0xff]
    %v19 = vld [vmem:[%s0 + $0x18] sm:$0xff]
    %v20 = vld [vmem:[%s0 + $0x20] sm:$0xff]
    %v21 = vld [vmem:[%s0 + $0x28] sm:$0xff]
    %v22 = vpack.c.bf16 %v19, %v16
    %v23 = vpack.c.bf16 %v20, %v17
    %v24 = vpack.c.bf16 %v21, %v18
    %v25 = vld [vmem:[%s1] sm:$0xf]
    %v26 = vld [vmem:[%s1 + $0x4] sm:$0xf]
    %v27 = vld [vmem:[%s1 + $0x8] sm:$0xf]
    %v28 = vld [vmem:[%s1 + $0xc] sm:$0xf]
    %v29 = vld [vmem:[%s1 + $0x10] sm:$0xf]
    %v30 = vld [vmem:[%s1 + $0x14] sm:$0xf]
    %v31 = vld [vmem:[%s1 + $0x18] sm:$0xf]
    %v32 = vld [vmem:[%s1 + $0x1c] sm:$0xf]
    %v33 = vld [vmem:[%s1 + $0x20] sm:$0xf]
    %v34 = vld [vmem:[%s1 + $0x24] sm:$0xf]
    %v35 = vld [vmem:[%s1 + $0x28] sm:$0xf]
    %v36 = vld [vmem:[%s1 + $0x2c] sm:$0xf]
    %v37 = vld [vmem:[%s1 + $0x30] sm:$0xf]
    %v38 = vld [vmem:[%s1 + $0x34] sm:$0xf]
    %v39 = vld [vmem:[%s1 + $0x38] sm:$0xf]
    %v40 = vld [vmem:[%s1 + $0x3c] sm:$0xf]
    %v41 = vld [vmem:[%s1 + $0x40] sm:$0xf]
    %v42 = vld [vmem:[%s1 + $0x44] sm:$0xf]
    %v43 = vld [vmem:[%s1 + $0x48] sm:$0xf]
    %v44 = vld [vmem:[%s1 + $0x4c] sm:$0xf]
    %v45 = vld [vmem:[%s1 + $0x50] sm:$0xf]
    %v46 = vld [vmem:[%s1 + $0x54] sm:$0xf]
    %v47 = vld [vmem:[%s1 + $0x58] sm:$0xf]
    %v48 = vld [vmem:[%s1 + $0x5c] sm:$0xf]
    %v49 = vld [vmem:[%s1 + $0x60] sm:$0xf]
    %v50 = vld [vmem:[%s1 + $0x64] sm:$0xf]
    %v51 = vld [vmem:[%s1 + $0x68] sm:$0xf]
    %v52 = vld [vmem:[%s1 + $0x6c] sm:$0xf]
    %v53 = vld [vmem:[%s1 + $0x70] sm:$0xf]
    %v54 = vld [vmem:[%s1 + $0x74] sm:$0xf]
    %v55 = vld [vmem:[%s1 + $0x78] sm:$0xf]
    %v56 = vld [vmem:[%s1 + $0x7c] sm:$0xf]
    %v57 = vld [vmem:[%s1 + $0x80] sm:$0xf]
    %v58 = vld [vmem:[%s1 + $0x84] sm:$0xf]
    %v59 = vld [vmem:[%s1 + $0x88] sm:$0xf]
    %v60 = vld [vmem:[%s1 + $0x8c] sm:$0xf]
    %v61 = vld [vmem:[%s1 + $0x90] sm:$0xf]
    %v62 = vld [vmem:[%s1 + $0x94] sm:$0xf]
    %v63 = vld [vmem:[%s1 + $0x98] sm:$0xf]
    %v64 = vld [vmem:[%s1 + $0x9c] sm:$0xf]
    %v65 = vld [vmem:[%s1 + $0xa0] sm:$0xf]
    %v66 = vld [vmem:[%s1 + $0xa4] sm:$0xf]
    %v67 = vld [vmem:[%s1 + $0xa8] sm:$0xf]
    %v68 = vld [vmem:[%s1 + $0xac] sm:$0xf]
    %v69 = vld [vmem:[%s1 + $0xb0] sm:$0xf]
    %v70 = vld [vmem:[%s1 + $0xb4] sm:$0xf]
    %v71 = vld [vmem:[%s1 + $0xb8] sm:$0xf]
    %v72 = vld [vmem:[%s1 + $0xbc] sm:$0xf]
    %v73 = vld [vmem:[%s2] sm:$0x1]
    %v75 = vlaneseq
    %v76 = vshrl.u32 %v75, 7
    %v77 = vsub.s32 0, %v76
    %v78 = vrot.slane %v73, %v77
    %v128 = vunpack.c.l.b16 %v25
    %v129 = vunpack.c.l.b16 %v26
    %v130 = vunpack.c.l.b16 %v27
    %v131 = vunpack.c.l.b16 %v28
    %v132 = vunpack.c.l.b16 %v29
    %v133 = vunpack.c.l.b16 %v30
    %v134 = vunpack.c.l.b16 %v31
    %v135 = vunpack.c.l.b16 %v32
    %v136 = vunpack.c.l.b16 %v33
    %v137 = vunpack.c.l.b16 %v34
    %v138 = vunpack.c.l.b16 %v35
    %v139 = vunpack.c.l.b16 %v36
    %v140 = vunpack.c.l.b16 %v37
    %v141 = vunpack.c.l.b16 %v38
    %v142 = vunpack.c.l.b16 %v39
    %v143 = vunpack.c.l.b16 %v40
    %v144 = vunpack.c.l.b16 %v41
    %v145 = vunpack.c.l.b16 %v42
    %v146 = vunpack.c.l.b16 %v43
    %v147 = vunpack.c.l.b16 %v44
    %v148 = vunpack.c.l.b16 %v45
    %v149 = vunpack.c.l.b16 %v46
    %v150 = vunpack.c.l.b16 %v47
    %v151 = vunpack.c.l.b16 %v48
    %v152 = vunpack.c.l.b16 %v49
    %v153 = vunpack.c.l.b16 %v50
    %v154 = vunpack.c.l.b16 %v51
    %v155 = vunpack.c.l.b16 %v52
    %v156 = vunpack.c.l.b16 %v53
    %v157 = vunpack.c.l.b16 %v54
    %v158 = vunpack.c.l.b16 %v55
    %v159 = vunpack.c.l.b16 %v56
    %v160 = vunpack.c.l.b16 %v57
    %v161 = vunpack.c.l.b16 %v58
    %v162 = vunpack.c.l.b16 %v59
    %v163 = vunpack.c.l.b16 %v60
    %v164 = vunpack.c.l.b16 %v61
    %v165 = vunpack.c.l.b16 %v62
    %v166 = vunpack.c.l.b16 %v63
    %v167 = vunpack.c.l.b16 %v64
    %v168 = vunpack.c.l.b16 %v65
    %v169 = vunpack.c.l.b16 %v66
    %v170 = vunpack.c.l.b16 %v67
    %v171 = vunpack.c.l.b16 %v68
    %v172 = vunpack.c.l.b16 %v69
    %v173 = vunpack.c.l.b16 %v70
    %v174 = vunpack.c.l.b16 %v71
    %v175 = vunpack.c.l.b16 %v72
    %v176 = vpack.c.b16 %v129, %v128
    %v177 = vpack.c.b16 %v131, %v130
    %v178 = vpack.c.b16 %v133, %v132
    %v179 = vpack.c.b16 %v135, %v134
    %v180 = vpack.c.b16 %v137, %v136
    %v181 = vpack.c.b16 %v139, %v138
    %v182 = vpack.c.b16 %v141, %v140
    %v183 = vpack.c.b16 %v143, %v142
    %v184 = vpack.c.b16 %v145, %v144
    %v185 = vpack.c.b16 %v147, %v146
    %v186 = vpack.c.b16 %v149, %v148
    %v187 = vpack.c.b16 %v151, %v150
    %v188 = vpack.c.b16 %v153, %v152
    %v189 = vpack.c.b16 %v155, %v154
    %v190 = vpack.c.b16 %v157, %v156
    %v191 = vpack.c.b16 %v159, %v158
    %v192 = vpack.c.b16 %v161, %v160
    %v193 = vpack.c.b16 %v163, %v162
    %v194 = vpack.c.b16 %v165, %v164
    %v195 = vpack.c.b16 %v167, %v166
    %v196 = vpack.c.b16 %v169, %v168
    %v197 = vpack.c.b16 %v171, %v170
    %v198 = vpack.c.b16 %v173, %v172
    %v199 = vpack.c.b16 %v175, %v174
    %224 = vmatprep.subr.bf16.mxu0 0
    %225 = vmatpush1.bf16.msra.mxu0 %v176
    %226 = vmatprep.subr.bf16.mxu0 0
    %227 = vmatpush1.bf16.msra.mxu0 %v177
    %228 = vmatprep.subr.bf16.mxu0 0
    %229 = vmatpush1.bf16.msra.mxu0 %v178
    %230 = vmatprep.subr.bf16.mxu0 0
    %231 = vmatpush1.bf16.msra.mxu0 %v179
    %232 = vmatprep.subr.bf16.mxu0 0
    %233 = vmatpush1.bf16.msra.mxu0 %v180
    %234 = vmatprep.subr.bf16.mxu0 0
    %235 = vmatpush1.bf16.msra.mxu0 %v181
    %236 = vmatprep.subr.bf16.mxu0 0
    %237 = vmatpush1.bf16.msra.mxu0 %v182
    %238 = vmatprep.subr.bf16.mxu0 0
    %239 = vmatpush1.bf16.msra.mxu0 %v183
    %240 = vmatprep.subr.bf16.mxu0 0
    %241 = vmatpush1.bf16.msra.mxu0 %v184
    %242 = vmatprep.subr.bf16.mxu0 0
    %243 = vmatpush1.bf16.msra.mxu0 %v185
    %244 = vmatprep.subr.bf16.mxu0 0
    %245 = vmatpush1.bf16.msra.mxu0 %v186
    %246 = vmatprep.subr.bf16.mxu0 0
    %247 = vmatpush1.bf16.msra.mxu0 %v187
    %248 = vmatprep.subr.bf16.mxu0 0
    %249 = vmatpush1.bf16.msra.mxu0 %v188
    %250 = vmatprep.subr.bf16.mxu0 0
    %251 = vmatpush1.bf16.msra.mxu0 %v189
    %252 = vmatprep.subr.bf16.mxu0 0
    %253 = vmatpush1.bf16.msra.mxu0 %v190
    %254 = vmatprep.subr.bf16.mxu0 0
    %255 = vmatpush1.bf16.msra.mxu0 %v191
    %256 = vmatprep.mubr.bf16.mxu0 %v23
    %257 = vmatmul.mubr.bf16.gmra.mrb[0].mxu0 %v22
    %v258 = vpop.f32.mrb[0].mxu0
    %v259 = vadd.f32 %v78, %v258
    %v260 = vpop.f32.mrb[0].mxu0
    %v261 = vpop.f32.mrb[0].mxu0
    %v262 = vadd.f32 %v78, %v261
    %v263 = vpop.f32.mrb[0].mxu0
    %264 = vdwg.mxu0
    %265 = vmatprep.subr.bf16.mxu0 0
    %266 = vmatpush1.bf16.msra.mxu0 %v192
    %267 = vmatprep.subr.bf16.mxu0 0
    %268 = vmatpush1.bf16.msra.mxu0 %v193
    %269 = vmatprep.subr.bf16.mxu0 0
    %270 = vmatpush1.bf16.msra.mxu0 %v194
    %271 = vmatprep.subr.bf16.mxu0 0
    %272 = vmatpush1.bf16.msra.mxu0 %v195
    %273 = vmatprep.subr.bf16.mxu0 0
    %274 = vmatpush1.bf16.msra.mxu0 %v196
    %275 = vmatprep.subr.bf16.mxu0 0
    %276 = vmatpush1.bf16.msra.mxu0 %v197
    %277 = vmatprep.subr.bf16.mxu0 0
    %278 = vmatpush1.bf16.msra.mxu0 %v198
    %279 = vmatprep.subr.bf16.mxu0 0
    %280 = vmatpush1.bf16.msra.mxu0 %v199
    %281 = vmatprep.subr.bf16.mxu0 0
    %282 = vmatpush1.bf16.msra.mxu0 0
    %283 = vmatprep.subr.bf16.mxu0 0
    %284 = vmatpush1.bf16.msra.mxu0 0
    %285 = vmatprep.subr.bf16.mxu0 0
    %286 = vmatpush1.bf16.msra.mxu0 0
    %287 = vmatprep.subr.bf16.mxu0 0
    %288 = vmatpush1.bf16.msra.mxu0 0
    %289 = vmatprep.subr.bf16.mxu0 0
    %290 = vmatpush1.bf16.msra.mxu0 0
    %291 = vmatprep.subr.bf16.mxu0 0
    %292 = vmatpush1.bf16.msra.mxu0 0
    %293 = vmatprep.subr.bf16.mxu0 0
    %294 = vmatpush1.bf16.msra.mxu0 0
    %295 = vmatprep.subr.bf16.mxu0 0
    %296 = vmatpush1.bf16.msra.mxu0 0
    %297 = vmatprep.mubr.bf16.mxu0 0
    %298 = vmatmul.mubr.bf16.gmra.mrb[0].mxu0 %v24
    %v299 = vpop.f32.mrb[0].mxu0
    %v300 = vadd.f32 %v259, %v299
    %v301 = vpop.f32.mrb[0].mxu0
    %v302 = vpop.f32.mrb[0].mxu0
    %v303 = vadd.f32 %v262, %v302
    %v304 = vpop.f32.mrb[0].mxu0
    %305 = vdwg.mxu0
    %vm306 = vcmask 261120
    %307 = vst.msk [vmem:[#allocation2] sm:$0xff] %vm306, %v300
    %308 = vst.msk [vmem:[#allocation2 + $0x8] sm:$0xff] %vm306, %v303
    // Predicated region
    $region14: #{tpu_custom_call.1} parent=1 // pred_check
      _
    $region15: #{tpu_custom_call.1} parent=1 // pred_check_branch
      %310 = sbr.rel (0) target = $region17
    $region16: #{tpu_custom_call.1} parent=1 // pred_region
      %s312 = ssub.s32 256, 256
      %313 = vsyncadd [#allocation3], %s312
      %s314 = sshll.u32 [#allocation2], 4
      %s315 = int_to_ptr.vmem [resolvable:$true] %s314
      %320 = dma.vmem_to_hbm [thread:$0]  %s315, 256, %s3, [#allocation3], 128, 128, 8
    $region17: #{tpu_custom_call.1} parent=1 // pred_fallthru
      _
    // Predicated region
    $region18: #{tpu_custom_call.1} parent=1 // pred_check
      _
    $region19: #{tpu_custom_call.1} parent=1 // pred_check_branch
      %322 = sbr.rel (0) target = $region21
    $region20: #{tpu_custom_call.1} parent=1 // pred_region
      %323 = dma.done [#allocation3], 256
    $region21: #{tpu_custom_call.1} parent=1 // pred_fallthru
      _
    %324 = vsyncpa [#allocation3], 1

</llo_original>
